<compile_context>
chip_gen: v6e
topology: v6e:2x2x1
jax: 0.10.0
libtpu: 0.0.40
codegen_flags: <defaults>
</compile_context>

<pallas_src>
import functools

import jax
import jax.numpy as jnp
import numpy as np
from jax import lax
from jax.experimental import pallas as pl
from jax.experimental.pallas import tpu as pltpu


# ----------------------------------------------------------------------------
# Fused kernel: MLP forward + du/dy + all loss terms in one pallas_call.
# ----------------------------------------------------------------------------
def _fused_pulse_loss_kernel(xT_ref, w1T_ref, b1_ref, w2_ref, b2_ref,
                             coef_ref, utT_ref, *out_refs,
                             subsets, weights, n_train, n_points,
                             ysymm_factor, reg_power, reg_factor):
    xT = xT_ref[...]            # (F, NP)   points on the lane axis
    w1T = w1T_ref[...]          # (H, F)
    b1 = b1_ref[...]            # (H, 1)
    w2 = w2_ref[...]            # (H, 1)    = W2[:, 0] as a column
    coef = coef_ref[...]        # (H, 1)    = W1[1, :] * W2[:, 0]
    utT = utT_ref[...]          # (1, NP)   targets (zeros over the ysymm tail)

    n_feat = xT.shape[0]

    # zT[h, n] = sum_k W1[k, h] * x[n, k]  (K = 4 -> VPU broadcast-MAC, no MXU)
    zT = w1T[:, 0:1] * xT[0:1, :]
    for k in range(1, n_feat):
        zT = zT + w1T[:, k:k + 1] * xT[k:k + 1, :]
    zT = zT + b1                                               # (H, NP)
    aT = jnp.tanh(zT)                                          # EUP, f32

    # u and du/dy as lane-dense (1, NP): VPU multiply + XLU sublane reduce
    uT = jnp.sum(w2 * aT, axis=0, keepdims=True) + b2_ref[...]       # (1, NP)
    duT = jnp.sum(coef * (1.0 - aT * aT), axis=0, keepdims=True)     # (1, NP)

    col = lax.broadcasted_iota(jnp.int32, uT.shape, 1)          # (1, NP)
    d = uT - utT
    d2 = d * d

    terms = []
    # per-subset weighted MSE over the training region (masked lane reduce)
    for i in range(len(subsets) - 1):
        s, e = subsets[i], subsets[i + 1]
        msk = (col >= s) & (col < e)
        ss = jnp.sum(jnp.where(msk, d2, 0.0), axis=1, keepdims=True)  # (1, 1)
        terms.append((weights[i] / float(e - s)) * ss)

    # regularization: sum_p ||W_p||_reg_power * reg_factor.  Integer powers are
    # special-cased (avoids exp(p*log|w|) on the EUP and log(0) corner cases).
    def _p_norm(w):
        if reg_power == 2:
            s_ = jnp.sum(jnp.sum(w * w, axis=1, keepdims=True),
                         axis=0, keepdims=True)
            return jnp.sqrt(s_)
        if reg_power == 1:
            return jnp.sum(jnp.sum(jnp.abs(w), axis=1, keepdims=True),
                           axis=0, keepdims=True)
        s_ = jnp.sum(jnp.sum(jnp.abs(w) ** reg_power, axis=1, keepdims=True),
                     axis=0, keepdims=True)
        return s_ ** (1.0 / reg_power)

    terms.append((_p_norm(w1T) + _p_norm(w2)) * reg_factor)

    # ysymm residual: factor * mean((du/dy)^2) over the trailing ysymm points
    ymsk = (col >= n_train) & (col < n_train + n_points)
    ys = jnp.sum(jnp.where(ymsk, duT * duT, 0.0), axis=1, keepdims=True)
    terms.append((ysymm_factor / float(n_points)) * ys)

    # in-kernel total
    total = terms[0]
    for t in terms[1:]:
        total = total + t
    terms.append(total)

    for ref, t in zip(out_refs, terms):
        ref[...] = t


def fused_pulse_loss(x_trains, u_trains, ysymm_pts, w1, b1, w2, b2, *,
                     subsets, weights, ysymm_factor, reg_power, reg_factor):
    n_train = x_trains.shape[0]
    n_points = ysymm_pts.shape[0]
    n_terms = (len(subsets) - 1) + 3            # fe_c*, reg, ysymm, total

    # lane-dense packing: points on the lane (last) axis, both batches fused.
    xT = jnp.concatenate([x_trains, ysymm_pts], axis=0).T.astype(jnp.float32)  # (F, NP)
    utT = jnp.concatenate(
        [u_trains.reshape(1, -1).astype(jnp.float32),
         jnp.zeros((1, n_points), jnp.float32)], axis=1)                       # (1, NP)
    w1T = w1.T                                       # (H, F)
    b1c = b1.reshape(-1, 1)                          # (H, 1)
    w2c = w2.reshape(-1, 1)                          # (H, 1)
    b2c = b2.reshape(1, 1)                           # (1, 1)
    coefc = (w1[1, :] * w2[:, 0]).reshape(-1, 1)     # (H, 1)

    # TODO(synk): for production-scale N/points add a "parallel" row grid (v7x
    # megacore) and tile against the 64 MiB VMEM budget; at this size a single
    # grid-less block is latency-optimal.
    kern = functools.partial(
        _fused_pulse_loss_kernel,
        subsets=tuple(int(s) for s in subsets),
        weights=tuple(float(w) for w in weights),
        n_train=int(n_train), n_points=int(n_points),
        ysymm_factor=float(ysymm_factor),
        reg_power=reg_power, reg_factor=float(reg_factor))

    vmem = pl.BlockSpec(memory_space=pltpu.MemorySpace.VMEM)
    outs = pl.pallas_call(
        kern,
        out_shape=tuple(jax.ShapeDtypeStruct((1, 1), jnp.float32)
                        for _ in range(n_terms)),
        in_specs=[vmem] * 7,
        out_specs=tuple(vmem for _ in range(n_terms)),
    )(xT, w1T, b1c, w2c, b2c, coefc, utT)
    return [o[0, 0] for o in outs]


# ----------------------------------------------------------------------------
# Synthetic "pulse" model (deterministic init; checkpoints are not loaded)
# ----------------------------------------------------------------------------
class SyntheticPulseModel:
    def __init__(self, in_dim, hidden, key):
        k1, k2 = jax.random.split(key)
        self.w1 = (0.3 * jax.random.normal(k1, (in_dim, hidden))).astype(jnp.float32)
        self.b1 = jnp.zeros((1, hidden), jnp.float32)
        self.w2 = (0.3 * jax.random.normal(k2, (hidden, 1))).astype(jnp.float32)
        self.b2 = jnp.zeros((1, 1), jnp.float32)

    def weight_params(self):
        # only 'weight'-named params participate in regularization
        return {'fc1.weight': self.w1, 'fc2.weight': self.w2}

    def pulsum_memory(self, x, _create_graph=True):
        # reference (non-Pallas) forward; the fused loss kernel evaluates the
        # model in-kernel and does not call this.
        return jnp.tanh(x @ self.w1 + self.b1) @ self.w2 + self.b2


def ysymm_points(seed, points_num):
    # TODO(synk): original uses a Sobol sequence (utility.PointGenerator); a
    # deterministic uniform sample with the same arctanh redistribution is used.
    key = jax.random.PRNGKey(seed)
    p = jax.random.uniform(key, (points_num, 3), jnp.float32,
                           minval=1e-4, maxval=1.0 - 1e-4)
    c0 = 0.25 * jnp.arctanh(2.0 * (p[:, 0] - 0.5))
    c1 = -0.25 * jnp.arctanh(p[:, 1])
    c2 = 0.25 * jnp.arctanh(p[:, 2])
    zeros = jnp.zeros_like(c0)
    return jnp.stack([c0, zeros, c1, c2], axis=1)                      # (P, 4)


# ----------------------------------------------------------------------------
# PulseLoss (model_type='pulse', loss_type='MSE', single subset list)
# ----------------------------------------------------------------------------
class PulseLoss:
    def __init__(self, loss_prop):
        self.loss_prop = loss_prop
        self.eval_type = loss_prop['model_evaluation_type']
        # TODO(synk): only loss_type in {'MSE','L2'}, model_type='pulse', and
        # the single-subset-list branch of loss_translate are implemented.
        ys = loss_prop['ysymm']
        # hoisted: ysymm points are loop-invariant for a fixed seed/count
        self._ysymm_pts = ysymm_points(ys['seed'], ys['points_num'])
        subs = loss_prop['subsets'][0]
        wgts = loss_prop['weights'][0]
        self._term_names = (['fe_c%i' % i for i in range(len(subs) - 1)]
                            + ['reg', 'ysymm', 'total'])
        self._loss_fn = jax.jit(functools.partial(
            fused_pulse_loss,
            subsets=tuple(int(s) for s in subs),
            weights=tuple(float(w) for w in wgts),
            ysymm_factor=float(ys['factor']),
            reg_power=loss_prop['reg_power'],
            reg_factor=float(loss_prop['reg_factor'])))

    def forward(self, model, x_trains_, u_trains_):
        if self.eval_type == 'internal':
            # TODO(synk): 'internal' evaluation (model.pulsum_internal) is not
            # modeled for the synthetic model; falls back to memory evaluation.
            pass
        vals = self._loss_fn(x_trains_, u_trains_, self._ysymm_pts,
                             model.w1, model.b1, model.w2, model.b2)
        return dict(zip(self._term_names, vals))


# ----------------------------------------------------------------------------
# Pure-JAX reference (for a correctness sanity check in __main__ only)
# ----------------------------------------------------------------------------
def _reference_terms(model, x_trains, u_trains, pts, lp):
    a = jnp.tanh(x_trains @ model.w1 + model.b1)
    u_pred = a @ model.w2 + model.b2
    terms = {}
    subs, wgts = lp['subsets'][0], lp['weights'][0]
    for i in range(len(subs) - 1):
        s, e = subs[i], subs[i + 1]
        dd = (u_pred[s:e] - u_trains[s:e]).reshape(-1)
        terms['fe_c%i' % i] = wgts[i] * jnp.mean(dd * dd)
    reg = jnp.sqrt(jnp.sum(model.w1 ** 2)) + jnp.sqrt(jnp.sum(model.w2 ** 2))
    terms['reg'] = reg * lp['reg_factor']
    ay = jnp.tanh(pts @ model.w1 + model.b1)
    coef = model.w1[1, :] * model.w2[:, 0]
    du = jnp.sum((1.0 - ay * ay) * coef[None, :], axis=1)
    terms['ysymm'] = lp['ysymm']['factor'] * jnp.mean(du * du)
    terms['total'] = sum(terms.values())
    return terms


if __name__ == "__main__":
    key = jax.random.PRNGKey(0)
    k_x, k_u, k_m = jax.random.split(key, 3)

    N, F, H = 128, 4, 32
    x_trains = jax.random.normal(k_x, (N, F), jnp.float32)
    u_trains = jax.random.normal(k_u, (N, 1), jnp.float32)

    loss_prop = {
        'loss_type': 'MSE',
        'model_type': 'pulse',
        'model_evaluation_type': 'memory',
        'subsets': [[0, 64, 128]],
        'weights': [[1.0, 0.5]],
        'reg_power': 2,
        'reg_factor': 1e-3,
        'ysymm': {'factor': 0.1, 'seed': 7, 'points_num': 64},
    }

    model = SyntheticPulseModel(in_dim=F, hidden=H, key=k_m)
    loss = PulseLoss(loss_prop)
    terms = loss.forward(model, x_trains, u_trains)
    jax.block_until_ready(terms['total'])

    ref = _reference_terms(model, x_trains, u_trains, loss._ysymm_pts, loss_prop)
    for name in terms:
        np.testing.assert_allclose(float(terms[name]), float(ref[name]),
                                   rtol=2e-3, atol=1e-6)
    print("KERNEL_OK")
</pallas_src>

<mosaic_0001>
module attributes {stable_mosaic.version = 11 : i64} {
  func.func @_fused_pulse_loss_kernel(%arg0: memref<4x192xf32, #tpu.memory_space<vmem>>, %arg1: memref<32x4xf32, #tpu.memory_space<vmem>>, %arg2: memref<32x1xf32, #tpu.memory_space<vmem>>, %arg3: memref<32x1xf32, #tpu.memory_space<vmem>>, %arg4: memref<1x1xf32, #tpu.memory_space<vmem>>, %arg5: memref<32x1xf32, #tpu.memory_space<vmem>>, %arg6: memref<1x192xf32, #tpu.memory_space<vmem>>, %arg7: memref<1x1xf32, #tpu.memory_space<vmem>>, %arg8: memref<1x1xf32, #tpu.memory_space<vmem>>, %arg9: memref<1x1xf32, #tpu.memory_space<vmem>>, %arg10: memref<1x1xf32, #tpu.memory_space<vmem>>, %arg11: memref<1x1xf32, #tpu.memory_space<vmem>>) attributes {dimension_semantics = [], scalar_prefetch = 0 : i64, scratch_operands = 0 : i64, tpu.core_type = #tpu.core_type<tc>} {
    %c0 = arith.constant 0 : index
    %c0_0 = arith.constant 0 : index
    %0 = vector.load %arg0[%c0, %c0_0] : memref<4x192xf32, #tpu.memory_space<vmem>>, vector<4x192xf32>
    %c0_1 = arith.constant 0 : index
    %c0_2 = arith.constant 0 : index
    %1 = vector.load %arg1[%c0_1, %c0_2] : memref<32x4xf32, #tpu.memory_space<vmem>>, vector<32x4xf32>
    %c0_3 = arith.constant 0 : index
    %c0_4 = arith.constant 0 : index
    %2 = vector.load %arg2[%c0_3, %c0_4] : memref<32x1xf32, #tpu.memory_space<vmem>>, vector<32x1xf32>
    %c0_5 = arith.constant 0 : index
    %c0_6 = arith.constant 0 : index
    %3 = vector.load %arg3[%c0_5, %c0_6] : memref<32x1xf32, #tpu.memory_space<vmem>>, vector<32x1xf32>
    %c0_7 = arith.constant 0 : index
    %c0_8 = arith.constant 0 : index
    %4 = vector.load %arg5[%c0_7, %c0_8] : memref<32x1xf32, #tpu.memory_space<vmem>>, vector<32x1xf32>
    %c0_9 = arith.constant 0 : index
    %c0_10 = arith.constant 0 : index
    %5 = vector.load %arg6[%c0_9, %c0_10] : memref<1x192xf32, #tpu.memory_space<vmem>>, vector<1x192xf32>
    %6 = vector.extract_strided_slice %1 {offsets = [0, 0], sizes = [32, 1], strides = [1, 1]} : vector<32x4xf32> to vector<32x1xf32>
    %7 = vector.extract_strided_slice %0 {offsets = [0, 0], sizes = [1, 192], strides = [1, 1]} : vector<4x192xf32> to vector<1x192xf32>
    %8 = vector.broadcast %6 : vector<32x1xf32> to vector<32x192xf32>
    %9 = vector.broadcast %7 : vector<1x192xf32> to vector<32x192xf32>
    %10 = arith.mulf %8, %9 : vector<32x192xf32>
    %11 = vector.extract_strided_slice %1 {offsets = [0, 1], sizes = [32, 1], strides = [1, 1]} : vector<32x4xf32> to vector<32x1xf32>
    %12 = vector.extract_strided_slice %0 {offsets = [1, 0], sizes = [1, 192], strides = [1, 1]} : vector<4x192xf32> to vector<1x192xf32>
    %13 = vector.broadcast %11 : vector<32x1xf32> to vector<32x192xf32>
    %14 = vector.broadcast %12 : vector<1x192xf32> to vector<32x192xf32>
    %15 = arith.mulf %13, %14 : vector<32x192xf32>
    %16 = arith.addf %10, %15 : vector<32x192xf32>
    %17 = vector.extract_strided_slice %1 {offsets = [0, 2], sizes = [32, 1], strides = [1, 1]} : vector<32x4xf32> to vector<32x1xf32>
    %18 = vector.extract_strided_slice %0 {offsets = [2, 0], sizes = [1, 192], strides = [1, 1]} : vector<4x192xf32> to vector<1x192xf32>
    %19 = vector.broadcast %17 : vector<32x1xf32> to vector<32x192xf32>
    %20 = vector.broadcast %18 : vector<1x192xf32> to vector<32x192xf32>
    %21 = arith.mulf %19, %20 : vector<32x192xf32>
    %22 = arith.addf %16, %21 : vector<32x192xf32>
    %23 = vector.extract_strided_slice %1 {offsets = [0, 3], sizes = [32, 1], strides = [1, 1]} : vector<32x4xf32> to vector<32x1xf32>
    %24 = vector.extract_strided_slice %0 {offsets = [3, 0], sizes = [1, 192], strides = [1, 1]} : vector<4x192xf32> to vector<1x192xf32>
    %25 = vector.broadcast %23 : vector<32x1xf32> to vector<32x192xf32>
    %26 = vector.broadcast %24 : vector<1x192xf32> to vector<32x192xf32>
    %27 = arith.mulf %25, %26 : vector<32x192xf32>
    %28 = arith.addf %22, %27 : vector<32x192xf32>
    %29 = vector.broadcast %2 : vector<32x1xf32> to vector<32x192xf32>
    %30 = arith.addf %28, %29 : vector<32x192xf32>
    %31 = math.tanh %30 : vector<32x192xf32>
    %32 = vector.broadcast %3 : vector<32x1xf32> to vector<32x192xf32>
    %33 = arith.mulf %32, %31 : vector<32x192xf32>
    %cst = arith.constant dense<0.000000e+00> : vector<192xf32>
    %34 = vector.multi_reduction <add>, %33, %cst [0] : vector<32x192xf32> to vector<192xf32>
    %35 = vector.shape_cast %34 : vector<192xf32> to vector<1x192xf32>
    %c0_11 = arith.constant 0 : index
    %c0_12 = arith.constant 0 : index
    %36 = vector.load %arg4[%c0_11, %c0_12] : memref<1x1xf32, #tpu.memory_space<vmem>>, vector<1x1xf32>
    %37 = vector.broadcast %36 : vector<1x1xf32> to vector<1x192xf32>
    %38 = arith.addf %35, %37 : vector<1x192xf32>
    %39 = arith.mulf %31, %31 : vector<32x192xf32>
    %cst_13 = arith.constant 1.000000e+00 : f32
    %40 = vector.broadcast %cst_13 : f32 to vector<32x192xf32>
    %41 = arith.subf %40, %39 : vector<32x192xf32>
    %42 = vector.broadcast %4 : vector<32x1xf32> to vector<32x192xf32>
    %43 = arith.mulf %42, %41 : vector<32x192xf32>
    %cst_14 = arith.constant dense<0.000000e+00> : vector<192xf32>
    %44 = vector.multi_reduction <add>, %43, %cst_14 [0] : vector<32x192xf32> to vector<192xf32>
    %45 = vector.shape_cast %44 : vector<192xf32> to vector<1x192xf32>
    %46 = tpu.iota {dimensions = array<i32: 1>} : vector<1x192xi32>
    %47 = arith.subf %38, %5 : vector<1x192xf32>
    %48 = arith.mulf %47, %47 : vector<1x192xf32>
    %c0_i32 = arith.constant 0 : i32
    %49 = vector.broadcast %c0_i32 : i32 to vector<1x192xi32>
    %50 = arith.cmpi sge, %46, %49 : vector<1x192xi32>
    %c64_i32 = arith.constant 64 : i32
    %51 = vector.broadcast %c64_i32 : i32 to vector<1x192xi32>
    %52 = arith.cmpi slt, %46, %51 : vector<1x192xi32>
    %53 = arith.andi %50, %52 : vector<1x192xi1>
    %cst_15 = arith.constant 0.000000e+00 : f32
    %54 = vector.broadcast %cst_15 : f32 to vector<1x192xf32>
    %55 = arith.select %53, %48, %54 : vector<1x192xi1>, vector<1x192xf32>
    %cst_16 = arith.constant dense<0.000000e+00> : vector<1xf32>
    %56 = vector.multi_reduction <add>, %55, %cst_16 [1] : vector<1x192xf32> to vector<1xf32>
    %57 = vector.shape_cast %56 : vector<1xf32> to vector<1x1xf32>
    %cst_17 = arith.constant 1.562500e-02 : f32
    %58 = vector.broadcast %cst_17 : f32 to vector<1x1xf32>
    %59 = arith.mulf %58, %57 : vector<1x1xf32>
    %c64_i32_18 = arith.constant 64 : i32
    %60 = vector.broadcast %c64_i32_18 : i32 to vector<1x192xi32>
    %61 = arith.cmpi sge, %46, %60 : vector<1x192xi32>
    %c128_i32 = arith.constant 128 : i32
    %62 = vector.broadcast %c128_i32 : i32 to vector<1x192xi32>
    %63 = arith.cmpi slt, %46, %62 : vector<1x192xi32>
    %64 = arith.andi %61, %63 : vector<1x192xi1>
    %cst_19 = arith.constant 0.000000e+00 : f32
    %65 = vector.broadcast %cst_19 : f32 to vector<1x192xf32>
    %66 = arith.select %64, %48, %65 : vector<1x192xi1>, vector<1x192xf32>
    %cst_20 = arith.constant dense<0.000000e+00> : vector<1xf32>
    %67 = vector.multi_reduction <add>, %66, %cst_20 [1] : vector<1x192xf32> to vector<1xf32>
    %68 = vector.shape_cast %67 : vector<1xf32> to vector<1x1xf32>
    %cst_21 = arith.constant 7.812500e-03 : f32
    %69 = vector.broadcast %cst_21 : f32 to vector<1x1xf32>
    %70 = arith.mulf %69, %68 : vector<1x1xf32>
    %71 = arith.mulf %1, %1 : vector<32x4xf32>
    %cst_22 = arith.constant dense<0.000000e+00> : vector<32xf32>
    %72 = vector.multi_reduction <add>, %71, %cst_22 [1] : vector<32x4xf32> to vector<32xf32>
    %73 = vector.shape_cast %72 : vector<32xf32> to vector<32x1xf32>
    %cst_23 = arith.constant dense<0.000000e+00> : vector<1xf32>
    %74 = vector.multi_reduction <add>, %73, %cst_23 [0] : vector<32x1xf32> to vector<1xf32>
    %75 = vector.shape_cast %74 : vector<1xf32> to vector<1x1xf32>
    %76 = math.sqrt %75 : vector<1x1xf32>
    %77 = arith.mulf %3, %3 : vector<32x1xf32>
    %cst_24 = arith.constant dense<0.000000e+00> : vector<32xf32>
    %78 = vector.multi_reduction <add>, %77, %cst_24 [1] : vector<32x1xf32> to vector<32xf32>
    %79 = vector.shape_cast %78 : vector<32xf32> to vector<32x1xf32>
    %cst_25 = arith.constant dense<0.000000e+00> : vector<1xf32>
    %80 = vector.multi_reduction <add>, %79, %cst_25 [0] : vector<32x1xf32> to vector<1xf32>
    %81 = vector.shape_cast %80 : vector<1xf32> to vector<1x1xf32>
    %82 = math.sqrt %81 : vector<1x1xf32>
    %83 = arith.addf %76, %82 : vector<1x1xf32>
    %cst_26 = arith.constant 1.000000e-03 : f32
    %84 = vector.broadcast %cst_26 : f32 to vector<1x1xf32>
    %85 = arith.mulf %83, %84 : vector<1x1xf32>
    %c128_i32_27 = arith.constant 128 : i32
    %86 = vector.broadcast %c128_i32_27 : i32 to vector<1x192xi32>
    %87 = arith.cmpi sge, %46, %86 : vector<1x192xi32>
    %c192_i32 = arith.constant 192 : i32
    %88 = vector.broadcast %c192_i32 : i32 to vector<1x192xi32>
    %89 = arith.cmpi slt, %46, %88 : vector<1x192xi32>
    %90 = arith.andi %87, %89 : vector<1x192xi1>
    %91 = arith.mulf %45, %45 : vector<1x192xf32>
    %cst_28 = arith.constant 0.000000e+00 : f32
    %92 = vector.broadcast %cst_28 : f32 to vector<1x192xf32>
    %93 = arith.select %90, %91, %92 : vector<1x192xi1>, vector<1x192xf32>
    %cst_29 = arith.constant dense<0.000000e+00> : vector<1xf32>
    %94 = vector.multi_reduction <add>, %93, %cst_29 [1] : vector<1x192xf32> to vector<1xf32>
    %95 = vector.shape_cast %94 : vector<1xf32> to vector<1x1xf32>
    %cst_30 = arith.constant 1.562500e-03 : f32
    %96 = vector.broadcast %cst_30 : f32 to vector<1x1xf32>
    %97 = arith.mulf %96, %95 : vector<1x1xf32>
    %98 = arith.addf %59, %70 : vector<1x1xf32>
    %99 = arith.addf %98, %85 : vector<1x1xf32>
    %100 = arith.addf %99, %97 : vector<1x1xf32>
    %c0_31 = arith.constant 0 : index
    %c0_32 = arith.constant 0 : index
    %101 = vector.load %arg7[%c0_31, %c0_32] : memref<1x1xf32, #tpu.memory_space<vmem>>, vector<1x1xf32>
    tpu.vector_store %arg7[%c0_31, %c0_32], %59 {strides = array<i32>} : memref<1x1xf32, #tpu.memory_space<vmem>>, vector<1x1xf32>,
    %c0_33 = arith.constant 0 : index
    %c0_34 = arith.constant 0 : index
    %102 = vector.load %arg8[%c0_33, %c0_34] : memref<1x1xf32, #tpu.memory_space<vmem>>, vector<1x1xf32>
    tpu.vector_store %arg8[%c0_33, %c0_34], %70 {strides = array<i32>} : memref<1x1xf32, #tpu.memory_space<vmem>>, vector<1x1xf32>,
    %c0_35 = arith.constant 0 : index
    %c0_36 = arith.constant 0 : index
    %103 = vector.load %arg9[%c0_35, %c0_36] : memref<1x1xf32, #tpu.memory_space<vmem>>, vector<1x1xf32>
    tpu.vector_store %arg9[%c0_35, %c0_36], %85 {strides = array<i32>} : memref<1x1xf32, #tpu.memory_space<vmem>>, vector<1x1xf32>,
    %c0_37 = arith.constant 0 : index
    %c0_38 = arith.constant 0 : index
    %104 = vector.load %arg10[%c0_37, %c0_38] : memref<1x1xf32, #tpu.memory_space<vmem>>, vector<1x1xf32>
    tpu.vector_store %arg10[%c0_37, %c0_38], %97 {strides = array<i32>} : memref<1x1xf32, #tpu.memory_space<vmem>>, vector<1x1xf32>,
    %c0_39 = arith.constant 0 : index
    %c0_40 = arith.constant 0 : index
    %105 = vector.load %arg11[%c0_39, %c0_40] : memref<1x1xf32, #tpu.memory_space<vmem>>, vector<1x1xf32>
    tpu.vector_store %arg11[%c0_39, %c0_40], %100 {strides = array<i32>} : memref<1x1xf32, #tpu.memory_space<vmem>>, vector<1x1xf32>,
    return
  }
}

</mosaic_0001>

<llo_original>
// kernel: fused_pulse_loss.1
$region0: #{fused_pulse_loss.1}
  #allocation0 [shape = 'u32[]', space=smem, size = 0x4, offset = 0x4, fixed_abs, tag = 'smem constant byte address 0x4 - core index']
  #allocation1 [shape = 'u32[144,128]{1,0:T(1,128)}', space=vmem, size = 0x12000, scoped, tag = 'internal scratch']
  #allocation2 [shape = 'f32[1,1]{1,0:T(1,128)S(1)}', space=vmem, size = 0x200, scoped, tag = 'scoped memory for fused_pulse_loss.1']
  %s0 = inlined_call_operand.vmem [shape: f32[4,192], index: 0, kind: input, shape index: {}]
  %s1 = inlined_call_operand.vmem [shape: f32[32,4], index: 1, kind: input, shape index: {}]
  %s2 = inlined_call_operand.vmem [shape: f32[32,1], index: 2, kind: input, shape index: {}]
  %s3 = inlined_call_operand.vmem [shape: f32[32,1], index: 3, kind: input, shape index: {}]
  %s4 = inlined_call_operand.<no memory space> [shape: f32[1,1], index: 4, kind: input, shape index: {}]
  %s5 = inlined_call_operand.vmem [shape: f32[32,1], index: 5, kind: input, shape index: {}]
  %s6 = inlined_call_operand.vmem [shape: f32[1,192], index: 6, kind: input, shape index: {}]
  %s7 = inlined_call_operand.hbm [shape: f32[1,1], index: 7, kind: output, shape index: {0}]
  %s8 = inlined_call_operand.hbm [shape: f32[1,1], index: 8, kind: output, shape index: {1}]
  %s9 = inlined_call_operand.hbm [shape: f32[1,1], index: 9, kind: output, shape index: {2}]
  %s10 = inlined_call_operand.hbm [shape: f32[1,1], index: 10, kind: output, shape index: {3}]
  %s11 = inlined_call_operand.hbm [shape: f32[1,1], index: 11, kind: output, shape index: {4}]
  %12 = xla_tuple %s7, %s8, %s9, %s10, %s11
  %s13 = sld [smem:[#allocation0]]
  $region70: #{fused_pulse_loss.1} parent=0
    _
  %s15 = ssub.s32 1, %s13
  %s16 = scalar_select 0, %s15, %s13
  %v17 = vstv %s4
  %18 = vst [vmem:[#allocation2] sm:$0x1] %v17
  $region1: #{fused_pulse_loss.1} parent=0
    #allocation3 [shape = 'u8[512]{0}', space=vmem, size = 0x400, scoped, tag = 'output window, operand 0, single buffered']
    #allocation4 [shape = 's32[1]{0}', space=sflag, size = 0x4, scoped, tag = 'scoped memory for fused_pulse_loss.1']
    #allocation5 [shape = 'u8[512]{0}', space=vmem, size = 0x400, scoped, tag = 'output window, operand 1, single buffered']
    #allocation6 [shape = 's32[1]{0}', space=sflag, size = 0x4, scoped, tag = 'scoped memory for fused_pulse_loss.1']
    #allocation7 [shape = 'u8[512]{0}', space=vmem, size = 0x400, scoped, tag = 'output window, operand 2, single buffered']
    #allocation8 [shape = 'u8[512]{0}', space=vmem, size = 0x400, scoped, tag = 'output window, operand 3, single buffered']
    #allocation9 [shape = 's32[1]{0}', space=sflag, size = 0x4, scoped, tag = 'scoped memory for fused_pulse_loss.1']
    #allocation10 [shape = 'u8[512]{0}', space=vmem, size = 0x400, scoped, tag = 'output window, operand 4, single buffered']
    %19 = vsyncpa [#allocation4], 0
    %20 = vsyncpa [#allocation6], 0
    %21 = vsyncpa [#allocation9], 0
    // Predicated region
    $region2: #{fused_pulse_loss.1} parent=1 // pred_check
      _
    $region3: #{fused_pulse_loss.1} parent=1 // pred_check_branch
      %23 = sbr.rel (0) target = $region5
    $region4: #{fused_pulse_loss.1} parent=1 // pred_region
      _
    $region5: #{fused_pulse_loss.1} parent=1 // pred_fallthru
      _
    // Predicated region
    $region6: #{fused_pulse_loss.1} parent=1 // pred_check
      _
    $region7: #{fused_pulse_loss.1} parent=1 // pred_check_branch
      %25 = sbr.rel (0) target = $region9
    $region8: #{fused_pulse_loss.1} parent=1 // pred_region
      _
    $region9: #{fused_pulse_loss.1} parent=1 // pred_fallthru
      _
    // Predicated region
    $region10: #{fused_pulse_loss.1} parent=1 // pred_check
      _
    $region11: #{fused_pulse_loss.1} parent=1 // pred_check_branch
      %27 = sbr.rel (0) target = $region13
    $region12: #{fused_pulse_loss.1} parent=1 // pred_region
      _
    $region13: #{fused_pulse_loss.1} parent=1 // pred_fallthru
      _
    // Predicated region
    $region14: #{fused_pulse_loss.1} parent=1 // pred_check
      _
    $region15: #{fused_pulse_loss.1} parent=1 // pred_check_branch
      %29 = sbr.rel (0) target = $region17
    $region16: #{fused_pulse_loss.1} parent=1 // pred_region
      _
    $region17: #{fused_pulse_loss.1} parent=1 // pred_fallthru
      _
    // Predicated region
    $region18: #{fused_pulse_loss.1} parent=1 // pred_check
      _
    $region19: #{fused_pulse_loss.1} parent=1 // pred_check_branch
      %31 = sbr.rel (0) target = $region21
    $region20: #{fused_pulse_loss.1} parent=1 // pred_region
      _
    $region21: #{fused_pulse_loss.1} parent=1 // pred_fallthru
      _
    // Predicated region
    $region22: #{fused_pulse_loss.1} parent=1 // pred_check
      _
    $region23: #{fused_pulse_loss.1} parent=1 // pred_check_branch
      %33 = sbr.rel (0) target = $region25
    $region24: #{fused_pulse_loss.1} parent=1 // pred_region
      _
    $region25: #{fused_pulse_loss.1} parent=1 // pred_fallthru
      _
    // Predicated region
    $region26: #{fused_pulse_loss.1} parent=1 // pred_check
      _
    $region27: #{fused_pulse_loss.1} parent=1 // pred_check_branch
      %35 = sbr.rel (0) target = $region29
    $region28: #{fused_pulse_loss.1} parent=1 // pred_region
      _
    $region29: #{fused_pulse_loss.1} parent=1 // pred_fallthru
      _
    %v36 = vld [vmem:[%s0] sm:$0xff]
    %v37 = vld [vmem:[%s1] sm:$0xff]
    %v38 = vld [vmem:[%s1 + $0x8] sm:$0xff]
    %v39 = vld [vmem:[%s1 + $0x10] sm:$0xff]
    %v40 = vld [vmem:[%s1 + $0x18] sm:$0xff]
    %v41 = vld [vmem:[%s2] sm:$0xff]
    %v42 = vld [vmem:[%s2 + $0x8] sm:$0xff]
    %v43 = vld [vmem:[%s2 + $0x10] sm:$0xff]
    %v44 = vld [vmem:[%s2 + $0x18] sm:$0xff]
    %v45 = vld [vmem:[%s3] sm:$0xff]
    %v46 = vld [vmem:[%s3 + $0x8] sm:$0xff]
    %v47 = vld [vmem:[%s3 + $0x10] sm:$0xff]
    %v48 = vld [vmem:[%s3 + $0x18] sm:$0xff]
    %v49 = vld [vmem:[%s5] sm:$0xff]
    %v50 = vld [vmem:[%s5 + $0x8] sm:$0xff]
    %v51 = vld [vmem:[%s5 + $0x10] sm:$0xff]
    %v52 = vld [vmem:[%s5 + $0x18] sm:$0xff]
    %v53 = vld [vmem:[%s6] sm:$0x3]
    %55 = vset.pattern.permute.xlu0 0
    %56 = vperm.xlu0 %55, %v37
    %v57 = vpop.permute.xlu0 %56
    %60 = vset.pattern.permute.xlu0 0
    %61 = vperm.xlu0 %60, %v38
    %v62 = vpop.permute.xlu0 %61
    %65 = vset.pattern.permute.xlu0 0
    %66 = vperm.xlu0 %65, %v39
    %v67 = vpop.permute.xlu0 %66
    %70 = vset.pattern.permute.xlu0 0
    %71 = vperm.xlu0 %70, %v40
    %v72 = vpop.permute.xlu0 %71
    %v75 = vlaneseq
    %v76 = vshrl.u32 %v75, 7
    %v77 = vsub.s32 0, %v76
    %v78 = vrot.slane %v36, %v77
    %v79 = vlaneseq
    %v80 = vshrl.u32 %v79, 7
    %v81 = vsub.s32 4, %v80
    %v82 = vrot.slane %v36, %v81
    %v85 = vlaneseq
    %v86 = vshrl.u32 %v85, 7
    %v87 = vsub.s32 0, %v86
    %v88 = vrot.slane %v78, %v87
    %v89 = vlaneseq
    %v90 = vshrl.u32 %v89, 7
    %v91 = vsub.s32 0, %v90
    %v92 = vrot.slane %v82, %v91
    %v93 = vmul.f32 %v57, %v88
    %v94 = vmul.f32 %v57, %v92
    %v95 = vmul.f32 %v62, %v88
    %v96 = vmul.f32 %v62, %v92
    %v97 = vmul.f32 %v67, %v88
    %v98 = vmul.f32 %v67, %v92
    %v99 = vmul.f32 %v72, %v88
    %v100 = vmul.f32 %v72, %v92
    %101 = vset.pattern.permute.xlu0 1
    %102 = vperm.xlu0 %101, %v37
    %v103 = vpop.permute.xlu0 %102
    %105 = vset.pattern.permute.xlu0 1
    %106 = vperm.xlu0 %105, %v38
    %v107 = vpop.permute.xlu0 %106
    %109 = vset.pattern.permute.xlu0 1
    %110 = vperm.xlu0 %109, %v39
    %v111 = vpop.permute.xlu0 %110
    %113 = vset.pattern.permute.xlu0 1
    %114 = vperm.xlu0 %113, %v40
    %v115 = vpop.permute.xlu0 %114
    %v117 = vlaneseq
    %v118 = vshrl.u32 %v117, 7
    %v119 = vsub.s32 1, %v118
    %v120 = vrot.slane %v36, %v119
    %v121 = vlaneseq
    %v122 = vshrl.u32 %v121, 7
    %v123 = vsub.s32 5, %v122
    %v124 = vrot.slane %v36, %v123
    %v127 = vlaneseq
    %v128 = vshrl.u32 %v127, 7
    %v129 = vsub.s32 1, %v128
    %v130 = vrot.slane %v120, %v129
    %v131 = vlaneseq
    %v132 = vshrl.u32 %v131, 7
    %v133 = vsub.s32 1, %v132
    %v134 = vrot.slane %v124, %v133
    %v135 = vmul.f32 %v103, %v130
    %v136 = vmul.f32 %v103, %v134
    %v137 = vmul.f32 %v107, %v130
    %v138 = vmul.f32 %v107, %v134
    %v139 = vmul.f32 %v111, %v130
    %v140 = vmul.f32 %v111, %v134
    %v141 = vmul.f32 %v115, %v130
    %v142 = vmul.f32 %v115, %v134
    %v143 = vadd.f32 %v93, %v135
    %v144 = vadd.f32 %v94, %v136
    %v145 = vadd.f32 %v95, %v137
    %v146 = vadd.f32 %v96, %v138
    %v147 = vadd.f32 %v97, %v139
    %v148 = vadd.f32 %v98, %v140
    %v149 = vadd.f32 %v99, %v141
    %v150 = vadd.f32 %v100, %v142
    %151 = vset.pattern.permute.xlu0 2
    %152 = vperm.xlu0 %151, %v37
    %v153 = vpop.permute.xlu0 %152
    %155 = vset.pattern.permute.xlu0 2
    %156 = vperm.xlu0 %155, %v38
    %v157 = vpop.permute.xlu0 %156
    %159 = vset.pattern.permute.xlu0 2
    %160 = vperm.xlu0 %159, %v39
    %v161 = vpop.permute.xlu0 %160
    %163 = vset.pattern.permute.xlu0 2
    %164 = vperm.xlu0 %163, %v40
    %v165 = vpop.permute.xlu0 %164
    %v167 = vlaneseq
    %v168 = vshrl.u32 %v167, 7
    %v169 = vsub.s32 2, %v168
    %v170 = vrot.slane %v36, %v169
    %v171 = vlaneseq
    %v172 = vshrl.u32 %v171, 7
    %v173 = vsub.s32 6, %v172
    %v174 = vrot.slane %v36, %v173
    %v177 = vlaneseq
    %v178 = vshrl.u32 %v177, 7
    %v179 = vsub.s32 2, %v178
    %v180 = vrot.slane %v170, %v179
    %v181 = vlaneseq
    %v182 = vshrl.u32 %v181, 7
    %v183 = vsub.s32 2, %v182
    %v184 = vrot.slane %v174, %v183
    %v185 = vmul.f32 %v153, %v180
    %v186 = vmul.f32 %v153, %v184
    %v187 = vmul.f32 %v157, %v180
    %v188 = vmul.f32 %v157, %v184
    %v189 = vmul.f32 %v161, %v180
    %v190 = vmul.f32 %v161, %v184
    %v191 = vmul.f32 %v165, %v180
    %v192 = vmul.f32 %v165, %v184
    %v193 = vadd.f32 %v143, %v185
    %v194 = vadd.f32 %v144, %v186
    %v195 = vadd.f32 %v145, %v187
    %v196 = vadd.f32 %v146, %v188
    %v197 = vadd.f32 %v147, %v189
    %v198 = vadd.f32 %v148, %v190
    %v199 = vadd.f32 %v149, %v191
    %v200 = vadd.f32 %v150, %v192
    %201 = vset.pattern.permute.xlu0 3
    %202 = vperm.xlu0 %201, %v37
    %v203 = vpop.permute.xlu0 %202
    %205 = vset.pattern.permute.xlu0 3
    %206 = vperm.xlu0 %205, %v38
    %v207 = vpop.permute.xlu0 %206
    %209 = vset.pattern.permute.xlu0 3
    %210 = vperm.xlu0 %209, %v39
    %v211 = vpop.permute.xlu0 %210
    %213 = vset.pattern.permute.xlu0 3
    %214 = vperm.xlu0 %213, %v40
    %v215 = vpop.permute.xlu0 %214
    %v217 = vlaneseq
    %v218 = vshrl.u32 %v217, 7
    %v219 = vsub.s32 3, %v218
    %v220 = vrot.slane %v36, %v219
    %v221 = vlaneseq
    %v222 = vshrl.u32 %v221, 7
    %v223 = vsub.s32 7, %v222
    %v224 = vrot.slane %v36, %v223
    %v227 = vlaneseq
    %v228 = vshrl.u32 %v227, 7
    %v229 = vsub.s32 3, %v228
    %v230 = vrot.slane %v220, %v229
    %v231 = vlaneseq
    %v232 = vshrl.u32 %v231, 7
    %v233 = vsub.s32 3, %v232
    %v234 = vrot.slane %v224, %v233
    %v235 = vmul.f32 %v203, %v230
    %v236 = vmul.f32 %v203, %v234
    %v237 = vmul.f32 %v207, %v230
    %v238 = vmul.f32 %v207, %v234
    %v239 = vmul.f32 %v211, %v230
    %v240 = vmul.f32 %v211, %v234
    %v241 = vmul.f32 %v215, %v230
    %v242 = vmul.f32 %v215, %v234
    %v243 = vadd.f32 %v193, %v235
    %v244 = vadd.f32 %v194, %v236
    %v245 = vadd.f32 %v195, %v237
    %v246 = vadd.f32 %v196, %v238
    %v247 = vadd.f32 %v197, %v239
    %v248 = vadd.f32 %v198, %v240
    %v249 = vadd.f32 %v199, %v241
    %v250 = vadd.f32 %v200, %v242
    %252 = vset.pattern.permute.xlu0 0
    %253 = vperm.xlu0 %252, %v41
    %v254 = vpop.permute.xlu0 %253
    %257 = vset.pattern.permute.xlu0 0
    %258 = vperm.xlu0 %257, %v42
    %v259 = vpop.permute.xlu0 %258
    %262 = vset.pattern.permute.xlu0 0
    %263 = vperm.xlu0 %262, %v43
    %v264 = vpop.permute.xlu0 %263
    %267 = vset.pattern.permute.xlu0 0
    %268 = vperm.xlu0 %267, %v44
    %v269 = vpop.permute.xlu0 %268
    %v271 = vadd.f32 %v243, %v254
    %v272 = vadd.f32 %v244, %v254
    %v273 = vadd.f32 %v245, %v259
    %v274 = vadd.f32 %v246, %v259
    %v275 = vadd.f32 %v247, %v264
    %v276 = vadd.f32 %v248, %v264
    %v277 = vadd.f32 %v249, %v269
    %v278 = vadd.f32 %v250, %v269
    %v279 = vtanh.pop %v271
    %v280 = vtanh.pop %v272
    %v281 = vtanh.pop %v273
    %v282 = vtanh.pop %v274
    %v283 = vtanh.pop %v275
    %v284 = vtanh.pop %v276
    %v285 = vtanh.pop %v277
    %v286 = vtanh.pop %v278
    %288 = vset.pattern.permute.xlu0 0
    %289 = vperm.xlu0 %288, %v45
    %v290 = vpop.permute.xlu0 %289
    %293 = vset.pattern.permute.xlu0 0
    %294 = vperm.xlu0 %293, %v46
    %v295 = vpop.permute.xlu0 %294
    %298 = vset.pattern.permute.xlu0 0
    %299 = vperm.xlu0 %298, %v47
    %v300 = vpop.permute.xlu0 %299
    %303 = vset.pattern.permute.xlu0 0
    %304 = vperm.xlu0 %303, %v48
    %v305 = vpop.permute.xlu0 %304
    %v307 = vmul.f32 %v290, %v279
    %v308 = vmul.f32 %v290, %v280
    %v309 = vmul.f32 %v295, %v281
    %v310 = vmul.f32 %v295, %v282
    %v311 = vmul.f32 %v300, %v283
    %v312 = vmul.f32 %v300, %v284
    %v313 = vmul.f32 %v305, %v285
    %v314 = vmul.f32 %v305, %v286
    %v315 = vadd.f32 %v307, %v309
    %v316 = vadd.f32 %v315, %v311
    %v317 = vadd.f32 %v316, %v313
    %v318 = vrot.slane %v317, 4
    %v319 = vadd.f32 %v317, %v318
    %v320 = vrot.slane %v319, 2
    %v321 = vadd.f32 %v319, %v320
    %v322 = vrot.slane %v321, 1
    %v323 = vadd.f32 %v321, %v322
    %vm324 = vcmask 523264
    %v325 = vsel %vm324, %v308, 0.0
    %v326 = vsel %vm324, %v310, 0.0
    %v327 = vadd.f32 %v325, %v326
    %v328 = vsel %vm324, %v312, 0.0
    %v329 = vadd.f32 %v327, %v328
    %v330 = vsel %vm324, %v314, 0.0
    %v331 = vadd.f32 %v329, %v330
    %v332 = vrot.slane %v331, 4
    %v333 = vadd.f32 %v331, %v332
    %v334 = vrot.slane %v333, 2
    %v335 = vadd.f32 %v333, %v334
    %v336 = vrot.slane %v335, 1
    %v337 = vadd.f32 %v335, %v336
    %v338 = vld [vmem:[#allocation2] sm:$0x1]
    %340 = vset.pattern.permute.xlu0 0
    %341 = vperm.xlu0 %340, %v338
    %v342 = vpop.permute.xlu0 %341
    %v344 = vlaneseq
    %v345 = vshrl.u32 %v344, 7
    %v346 = vsub.s32 0, %v345
    %v347 = vrot.slane %v342, %v346
    %v348 = vadd.f32 %v323, %v347
    %v349 = vadd.f32 %v337, %v347
    %v350 = vmul.f32 %v279, %v279
    %v351 = vmul.f32 %v280, %v280
    %v352 = vmul.f32 %v281, %v281
    %v353 = vmul.f32 %v282, %v282
    %v354 = vmul.f32 %v283, %v283
    %v355 = vmul.f32 %v284, %v284
    %v356 = vmul.f32 %v285, %v285
    %v357 = vmul.f32 %v286, %v286
    %v358 = vsub.f32 1.0, %v350
    %v359 = vsub.f32 1.0, %v351
    %v360 = vsub.f32 1.0, %v352
    %v361 = vsub.f32 1.0, %v353
    %v362 = vsub.f32 1.0, %v354
    %v363 = vsub.f32 1.0, %v355
    %v364 = vsub.f32 1.0, %v356
    %v365 = vsub.f32 1.0, %v357
    %367 = vset.pattern.permute.xlu0 0
    %368 = vperm.xlu0 %367, %v49
    %v369 = vpop.permute.xlu0 %368
    %372 = vset.pattern.permute.xlu0 0
    %373 = vperm.xlu0 %372, %v50
    %v374 = vpop.permute.xlu0 %373
    %377 = vset.pattern.permute.xlu0 0
    %378 = vperm.xlu0 %377, %v51
    %v379 = vpop.permute.xlu0 %378
    %382 = vset.pattern.permute.xlu0 0
    %383 = vperm.xlu0 %382, %v52
    %v384 = vpop.permute.xlu0 %383
    %v386 = vmul.f32 %v369, %v358
    %v387 = vmul.f32 %v369, %v359
    %v388 = vmul.f32 %v374, %v360
    %v389 = vmul.f32 %v374, %v361
    %v390 = vmul.f32 %v379, %v362
    %v391 = vmul.f32 %v379, %v363
    %v392 = vmul.f32 %v384, %v364
    %v393 = vmul.f32 %v384, %v365
    %v394 = vadd.f32 %v386, %v388
    %v395 = vadd.f32 %v394, %v390
    %v396 = vadd.f32 %v395, %v392
    %v397 = vrot.slane %v396, 4
    %v398 = vadd.f32 %v396, %v397
    %v399 = vrot.slane %v398, 2
    %v400 = vadd.f32 %v398, %v399
    %v401 = vrot.slane %v400, 1
    %v402 = vadd.f32 %v400, %v401
    %v403 = vsel %vm324, %v387, 0.0
    %v404 = vsel %vm324, %v389, 0.0
    %v405 = vadd.f32 %v403, %v404
    %v406 = vsel %vm324, %v391, 0.0
    %v407 = vadd.f32 %v405, %v406
    %v408 = vsel %vm324, %v393, 0.0
    %v409 = vadd.f32 %v407, %v408
    %v410 = vrot.slane %v409, 4
    %v411 = vadd.f32 %v409, %v410
    %v412 = vrot.slane %v411, 2
    %v413 = vadd.f32 %v411, %v412
    %v414 = vrot.slane %v413, 1
    %v415 = vadd.f32 %v413, %v414
    %v416 = vlaneseq
    %v417 = vand.u32 %v416, 127
    %v418 = vadd.s32 %v417, 128
    %v420 = vlaneseq
    %v421 = vshrl.u32 %v420, 7
    %v422 = vsub.s32 0, %v421
    %v423 = vrot.slane %v53, %v422
    %v424 = vlaneseq
    %v425 = vshrl.u32 %v424, 7
    %v426 = vsub.s32 1, %v425
    %v427 = vrot.slane %v53, %v426
    %v430 = vsub.f32 %v348, %v423
    %v431 = vsub.f32 %v349, %v427
    %v432 = vmul.f32 %v430, %v430
    %v433 = vmul.f32 %v431, %v431
    %vm434 = vcmp.ge.s32.totalorder %v417, 0
    %vm435 = vcmp.ge.s32.totalorder %v418, 0
    %vm436 = vcmp.lt.s32.totalorder %v417, 64
    %vm437 = vcmp.lt.s32.totalorder %v418, 64
    %vm438 = vmand %vm434, %vm436
    %vm439 = vmand %vm435, %vm437
    %v440 = vsel %vm438, %v432, 0.0
    %v441 = vsel %vm439, %v433, 0.0
    %vm442 = vcmask 1040384
    %v443 = vsel %vm442, %v440, 0.0
    %vm444 = vcmask 516096
    %v445 = vsel %vm444, %v441, 0.0
    %v446 = vadd.f32 %v443, %v445
    %447 = vadd.xlane.f32.xlu0 %v446
    %v448 = vpop.xlane.xlu0 %447
    %v449 = vmul.f32 %v448, 0.015625
    %vm450 = vcmp.ge.s32.totalorder %v417, 64
    %vm451 = vcmp.ge.s32.totalorder %v418, 64
    %vm452 = vcmp.lt.s32.totalorder %v417, 128
    %vm453 = vcmp.lt.s32.totalorder %v418, 128
    %vm454 = vmand %vm450, %vm452
    %vm455 = vmand %vm451, %vm453
    %v456 = vsel %vm454, %v432, 0.0
    %v457 = vsel %vm455, %v433, 0.0
    %v458 = vsel %vm442, %v456, 0.0
    %v459 = vsel %vm444, %v457, 0.0
    %v460 = vadd.f32 %v458, %v459
    %461 = vadd.xlane.f32.xlu0 %v460
    %v462 = vpop.xlane.xlu0 %461
    %v463 = vmul.f32 %v462, 0.0078125
    %v464 = vmul.f32 %v37, %v37
    %v465 = vmul.f32 %v38, %v38
    %v466 = vmul.f32 %v39, %v39
    %v467 = vmul.f32 %v40, %v40
    %vm468 = vcmask 31744
    %v469 = vsel %vm468, %v464, 0.0
    %470 = vadd.xlane.f32.xlu0 %v469
    %v471 = vpop.xlane.xlu0 %470
    %v472 = vsel %vm468, %v465, 0.0
    %473 = vadd.xlane.f32.xlu0 %v472
    %v474 = vpop.xlane.xlu0 %473
    %v475 = vsel %vm468, %v466, 0.0
    %476 = vadd.xlane.f32.xlu0 %v475
    %v477 = vpop.xlane.xlu0 %476
    %v478 = vsel %vm468, %v467, 0.0
    %479 = vadd.xlane.f32.xlu0 %v478
    %v480 = vpop.xlane.xlu0 %479
    %v481 = vadd.f32 %v471, %v474
    %v482 = vadd.f32 %v481, %v477
    %v483 = vadd.f32 %v482, %v480
    %v484 = vrot.slane %v483, 4
    %v485 = vadd.f32 %v483, %v484
    %v486 = vrot.slane %v485, 2
    %v487 = vadd.f32 %v485, %v486
    %v488 = vrot.slane %v487, 1
    %v489 = vadd.f32 %v487, %v488
    %v490 = vrsqrt.pop %v489
    %v491 = vmul.f32 %v489, %v490
    %vm492 = vcmp.eq.f32.partialorder %v489, inf
    %v493 = vsel %vm492, %v489, %v491
    %vm494 = vcmp.eq.f32.partialorder %v489, 0.0
    %v495 = vand.u32 %v489, 2147483648
    %v496 = vsel %vm494, %v495, %v493
    %v497 = vmul.f32 %v45, %v45
    %v498 = vmul.f32 %v46, %v46
    %v499 = vmul.f32 %v47, %v47
    %v500 = vmul.f32 %v48, %v48
    %v501 = vadd.f32 %v497, 0.0
    %v502 = vadd.f32 %v498, 0.0
    %v503 = vadd.f32 %v499, 0.0
    %v504 = vadd.f32 %v500, 0.0
    %vm505 = vcmask 7168
    %v506 = vsel %vm505, %v501, 0.0
    %v507 = vsel %vm505, %v502, 0.0
    %v508 = vadd.f32 %v506, %v507
    %v509 = vsel %vm505, %v503, 0.0
    %v510 = vadd.f32 %v508, %v509
    %v511 = vsel %vm505, %v504, 0.0
    %v512 = vadd.f32 %v510, %v511
    %v513 = vrot.slane %v512, 4
    %v514 = vadd.f32 %v512, %v513
    %v515 = vrot.slane %v514, 2
    %v516 = vadd.f32 %v514, %v515
    %v517 = vrot.slane %v516, 1
    %v518 = vadd.f32 %v516, %v517
    %v519 = vrsqrt.pop %v518
    %v520 = vmul.f32 %v518, %v519
    %vm521 = vcmp.eq.f32.partialorder %v518, inf
    %v522 = vsel %vm521, %v518, %v520
    %vm523 = vcmp.eq.f32.partialorder %v518, 0.0
    %v524 = vand.u32 %v518, 2147483648
    %v525 = vsel %vm523, %v524, %v522
    %v526 = vadd.f32 %v496, %v525
    %v527 = vmul.f32 %v526, 0.001
    %vm528 = vcmp.ge.s32.totalorder %v417, 128
    %vm529 = vcmp.ge.s32.totalorder %v418, 128
    %vm530 = vcmp.lt.s32.totalorder %v417, 192
    %vm531 = vcmp.lt.s32.totalorder %v418, 192
    %vm532 = vmand %vm528, %vm530
    %vm533 = vmand %vm529, %vm531
    %v534 = vmul.f32 %v402, %v402
    %v535 = vmul.f32 %v415, %v415
    %v536 = vsel %vm532, %v534, 0.0
    %v537 = vsel %vm533, %v535, 0.0
    %v538 = vsel %vm324, %v537, 0.0
    %v539 = vadd.f32 %v536, %v538
    %540 = vadd.xlane.f32.xlu0 %v539
    %v541 = vpop.xlane.xlu0 %540
    %v542 = vmul.f32 %v541, 0.0015625
    %v543 = vadd.f32 %v449, %v463
    %v544 = vadd.f32 %v543, %v527
    %v545 = vadd.f32 %v544, %v542
    %vm546 = vcmask 0
    %547 = vst.msk [vmem:[#allocation3] sm:$0x1] %vm546, %v449
    %548 = vst.msk [vmem:[#allocation5] sm:$0x1] %vm546, %v463
    %549 = vst.msk [vmem:[#allocation7] sm:$0x1] %vm546, %v527
    %550 = vst.msk [vmem:[#allocation8] sm:$0x1] %vm546, %v542
    %551 = vst.msk [vmem:[#allocation10] sm:$0x1] %vm546, %v545
    // Predicated region
    $region30: #{fused_pulse_loss.1} parent=1 // pred_check
      _
    $region31: #{fused_pulse_loss.1} parent=1 // pred_check_branch
      %553 = sbr.rel (0) target = $region33
    $region32: #{fused_pulse_loss.1} parent=1 // pred_region
      %s555 = ssub.s32 16, 16
      %556 = vsyncadd [#allocation4], %s555
      %s558 = sshll.u32 [#allocation3], 4
      %s559 = int_to_ptr.vmem [resolvable:$true] %s558
      %561 = dma.vmem_to_hbm [thread:$0]  %s559, 16, %s7, [#allocation4]
    $region33: #{fused_pulse_loss.1} parent=1 // pred_fallthru
      _
    // Predicated region
    $region34: #{fused_pulse_loss.1} parent=1 // pred_check
      _
    $region35: #{fused_pulse_loss.1} parent=1 // pred_check_branch
      %563 = sbr.rel (0) target = $region37
    $region36: #{fused_pulse_loss.1} parent=1 // pred_region
      %s565 = ssub.s32 16, 16
      %566 = vsyncadd [#allocation6], %s565
      %s568 = sshll.u32 [#allocation5], 4
      %s569 = int_to_ptr.vmem [resolvable:$true] %s568
      %571 = dma.vmem_to_hbm [thread:$0]  %s569, 16, %s8, [#allocation6]
    $region37: #{fused_pulse_loss.1} parent=1 // pred_fallthru
      _
    // Predicated region
    $region38: #{fused_pulse_loss.1} parent=1 // pred_check
      _
    $region39: #{fused_pulse_loss.1} parent=1 // pred_check_branch
      %573 = sbr.rel (0) target = $region41
    $region40: #{fused_pulse_loss.1} parent=1 // pred_region
      %s575 = ssub.s32 16, 16
      %576 = vsyncadd [#allocation6], %s575
      %s578 = sshll.u32 [#allocation7], 4
      %s579 = int_to_ptr.vmem [resolvable:$true] %s578
      %581 = dma.vmem_to_hbm [thread:$0]  %s579, 16, %s9, [#allocation6]
    $region41: #{fused_pulse_loss.1} parent=1 // pred_fallthru
      _
    // Predicated region
    $region42: #{fused_pulse_loss.1} parent=1 // pred_check
      _
    $region43: #{fused_pulse_loss.1} parent=1 // pred_check_branch
      %583 = sbr.rel (0) target = $region45
    $region44: #{fused_pulse_loss.1} parent=1 // pred_region
      %s585 = ssub.s32 16, 16
      %586 = vsyncadd [#allocation9], %s585
      %s588 = sshll.u32 [#allocation8], 4
      %s589 = int_to_ptr.vmem [resolvable:$true] %s588
      %591 = dma.vmem_to_hbm [thread:$0]  %s589, 16, %s10, [#allocation9]
    $region45: #{fused_pulse_loss.1} parent=1 // pred_fallthru
      _
    // Predicated region
    $region46: #{fused_pulse_loss.1} parent=1 // pred_check
      _
    $region47: #{fused_pulse_loss.1} parent=1 // pred_check_branch
      %593 = sbr.rel (0) target = $region49
    $region48: #{fused_pulse_loss.1} parent=1 // pred_region
      %s595 = ssub.s32 16, 16
      %596 = vsyncadd [#allocation9], %s595
      %s598 = sshll.u32 [#allocation10], 4
      %s599 = int_to_ptr.vmem [resolvable:$true] %s598
      %601 = dma.vmem_to_hbm [thread:$0]  %s599, 16, %s11, [#allocation9]
    $region49: #{fused_pulse_loss.1} parent=1 // pred_fallthru
      _
    // Predicated region
    $region50: #{fused_pulse_loss.1} parent=1 // pred_check
      _
    $region51: #{fused_pulse_loss.1} parent=1 // pred_check_branch
      %603 = sbr.rel (0) target = $region53
    $region52: #{fused_pulse_loss.1} parent=1 // pred_region
      %604 = dma.done [#allocation4], 16
    $region53: #{fused_pulse_loss.1} parent=1 // pred_fallthru
      _
    // Predicated region
    $region54: #{fused_pulse_loss.1} parent=1 // pred_check
      _
    $region55: #{fused_pulse_loss.1} parent=1 // pred_check_branch
      %606 = sbr.rel (0) target = $region57
    $region56: #{fused_pulse_loss.1} parent=1 // pred_region
      %607 = dma.done [#allocation6], 16
    $region57: #{fused_pulse_loss.1} parent=1 // pred_fallthru
      _
    // Predicated region
    $region58: #{fused_pulse_loss.1} parent=1 // pred_check
      _
    $region59: #{fused_pulse_loss.1} parent=1 // pred_check_branch
      %609 = sbr.rel (0) target = $region61
    $region60: #{fused_pulse_loss.1} parent=1 // pred_region
      %610 = dma.done [#allocation6], 16
    $region61: #{fused_pulse_loss.1} parent=1 // pred_fallthru
      _
    // Predicated region
    $region62: #{fused_pulse_loss.1} parent=1 // pred_check
      _
    $region63: #{fused_pulse_loss.1} parent=1 // pred_check_branch
      %612 = sbr.rel (0) target = $region65
    $region64: #{fused_pulse_loss.1} parent=1 // pred_region
      %613 = dma.done [#allocation9], 16
    $region65: #{fused_pulse_loss.1} parent=1 // pred_fallthru
      _
    // Predicated region
    $region66: #{fused_pulse_loss.1} parent=1 // pred_check
      _
    $region67: #{fused_pulse_loss.1} parent=1 // pred_check_branch
      %615 = sbr.rel (0) target = $region69
    $region68: #{fused_pulse_loss.1} parent=1 // pred_region
      %616 = dma.done [#allocation9], 16
    $region69: #{fused_pulse_loss.1} parent=1 // pred_fallthru
      _
    %617 = vsyncpa [#allocation4], 1
    %618 = vsyncpa [#allocation6], 1
    %619 = vsyncpa [#allocation9], 1

</llo_original>
